<compile_context>
chip_gen: v5e
topology: v5e:2x2
jax: 0.10.0
libtpu: 0.0.40
codegen_flags: <defaults>
</compile_context>

<pallas_src>
import jax
import jax.numpy as jnp
from jax import lax
from jax.experimental import pallas as pl
from jax.experimental.pallas import tpu as pltpu


def tagger_kernel(char_emb_ref, word_emb_ref,
                  wih_c_t_ref, whh_c_t_ref, b_c_ref,
                  wih_ww_t_ref, wih_wc_t_ref, b_w_ref,
                  w_tag_t_ref, b_tag_ref,
                  out_ref,
                  xw_ref):
    T = char_emb_ref.shape[0]
    Hc = whh_c_t_ref.shape[0]          # whh_c_t: (Hc, 4*Hc)
    Hw = b_w_ref.shape[1] // 4

    # Recurrent weight loaded once, outside the serial loop.
    whh_c_t = whh_c_t_ref[...]         # (Hc, 4*Hc), lane-dense

    # ---- Hoisted: input projection for every char step in one MXU call ----
    # (T, Ec) @ (Ec, 4Hc) + (1, 4Hc)  -> (T, 4Hc), stored in VMEM scratch.
    xw_ref[...] = (jnp.dot(char_emb_ref[...], wih_c_t_ref[...],
                           preferred_element_type=jnp.float32)
                   + b_c_ref[...])

    # ---- Hoisted: word-LSTM input projection (independent of h_char) ----
    gates_w_pre = (jnp.dot(word_emb_ref[...], wih_ww_t_ref[...],
                           preferred_element_type=jnp.float32)
                   + b_w_ref[...])     # (1, 4*Hw)

    # ---- char LSTM recurrence: only the h-dependent matmul stays inside ----
    def body(t, carry):
        h, c = carry
        gates = xw_ref[pl.ds(t, 1), :] + jnp.dot(
            h, whh_c_t, preferred_element_type=jnp.float32)      # (1, 4*Hc)
        # Whole-row activations (4*Hc fits one vreg), then per-gate lane slices.
        sig = jax.nn.sigmoid(gates)
        tnh = jnp.tanh(gates)
        i = sig[:, 0 * Hc:1 * Hc]
        f = sig[:, 1 * Hc:2 * Hc]
        g = tnh[:, 2 * Hc:3 * Hc]
        o = sig[:, 3 * Hc:4 * Hc]
        c_new = f * c + i * g
        h_new = o * jnp.tanh(c_new)
        return h_new, c_new

    h0 = jnp.zeros((1, Hc), jnp.float32)
    c0 = jnp.zeros((1, Hc), jnp.float32)
    h_char, _ = lax.fori_loop(0, T, body, (h0, c0), unroll=True)  # (1, Hc)

    # ---- word LSTM single step (initial hidden/cell = 0 -> whh_w term and f*c0 are dead) ----
    gates_w = gates_w_pre + jnp.dot(h_char, wih_wc_t_ref[...],
                                    preferred_element_type=jnp.float32)
    sig_w = jax.nn.sigmoid(gates_w)
    tnh_w = jnp.tanh(gates_w)
    i_w = sig_w[:, 0 * Hw:1 * Hw]
    g_w = tnh_w[:, 2 * Hw:3 * Hw]
    o_w = sig_w[:, 3 * Hw:4 * Hw]
    c_w = i_w * g_w
    h_w = o_w * jnp.tanh(c_w)                                     # (1, Hw)

    # ---- hidden2tag + log_softmax over axis 1 ----
    tag_space = (jnp.dot(h_w, w_tag_t_ref[...],
                         preferred_element_type=jnp.float32)
                 + b_tag_ref[...])                                # (1, tagset)
    m = jnp.max(tag_space, axis=1, keepdims=True)
    z = tag_space - m
    lse = jnp.log(jnp.sum(jnp.exp(z), axis=1, keepdims=True))
    out_ref[...] = z - lse


def lstm_tagger_plus_forward(char_embeds, word_embed, params):
    """All inputs f32, 2-D. Returns (1, tagset_size) log-probs."""
    (wih_c, whh_c, b_c, wih_ww, wih_wc, whh_w, b_w, w_tag, b_tag) = params
    del whh_w  # multiplied by the zero initial word-hidden state -> dead; not sent to the kernel

    # Pre-transpose weights to [in, out] (lane-dense) so the kernel feeds the MXU directly.
    wih_c_t = wih_c.T        # (Ec, 4*Hc)
    whh_c_t = whh_c.T        # (Hc, 4*Hc)
    wih_ww_t = wih_ww.T      # (Ew, 4*Hw)
    wih_wc_t = wih_wc.T      # (Hc, 4*Hw)
    w_tag_t = w_tag.T        # (Hw, tagset)

    T = char_embeds.shape[0]
    Hc = whh_c.shape[1]
    tagset = w_tag.shape[0]

    inputs = (char_embeds, word_embed, wih_c_t, whh_c_t, b_c,
              wih_ww_t, wih_wc_t, b_w, w_tag_t, b_tag)

    vmem_spec = pl.BlockSpec(memory_space=pltpu.MemorySpace.VMEM)

    return pl.pallas_call(
        tagger_kernel,
        out_shape=jax.ShapeDtypeStruct((1, tagset), jnp.float32),
        in_specs=[vmem_spec] * len(inputs),
        out_specs=vmem_spec,
        scratch_shapes=[pltpu.VMEM((T, 4 * Hc), jnp.float32)],
    )(*inputs)
    # TODO(synk): for throughput, batch many word/char sequences into the sublane dim
    # (and a "parallel" grid axis on v7x); kept batch=1 to match the module semantics.


def _reference(char_embeds, word_embed, params):
    (wih_c, whh_c, b_c, wih_ww, wih_wc, whh_w, b_w, w_tag, b_tag) = params
    Hc = whh_c.shape[1]
    Hw = whh_w.shape[1]
    h = jnp.zeros((1, Hc), jnp.float32)
    c = jnp.zeros((1, Hc), jnp.float32)
    for t in range(char_embeds.shape[0]):
        x = char_embeds[t:t + 1]
        gates = x @ wih_c.T + h @ whh_c.T + b_c
        i = jax.nn.sigmoid(gates[:, :Hc]); f = jax.nn.sigmoid(gates[:, Hc:2 * Hc])
        g = jnp.tanh(gates[:, 2 * Hc:3 * Hc]); o = jax.nn.sigmoid(gates[:, 3 * Hc:])
        c = f * c + i * g
        h = o * jnp.tanh(c)
    hw = jnp.zeros((1, Hw), jnp.float32)
    cw = jnp.zeros((1, Hw), jnp.float32)
    gates = word_embed @ wih_ww.T + h @ wih_wc.T + hw @ whh_w.T + b_w
    i = jax.nn.sigmoid(gates[:, :Hw]); f = jax.nn.sigmoid(gates[:, Hw:2 * Hw])
    g = jnp.tanh(gates[:, 2 * Hw:3 * Hw]); o = jax.nn.sigmoid(gates[:, 3 * Hw:])
    cw = f * cw + i * g
    hw = o * jnp.tanh(cw)
    tag_space = hw @ w_tag.T + b_tag
    return jax.nn.log_softmax(tag_space, axis=1)


if __name__ == "__main__":
    # Small, forward-consistent dimensions
    word_embedding_dim = 16
    char_embedding_dim = 8
    word_hidden_dim = 32
    char_hidden_dim = 16
    word_vocab_size = 24
    char_vocab_size = 30
    tagset_size = 10
    char_seq_len = 8            # len(char_sequence)
    # NOTE: word_sequence must have length 1 for the module's view(1,1,-1)/concat to be consistent.

    key = jax.random.PRNGKey(0)
    ks = jax.random.split(key, 12)

    def u(k, shape, fan):
        bound = 1.0 / jnp.sqrt(fan)
        return jax.random.uniform(k, shape, jnp.float32, -bound, bound)

    # Parameters (deterministic, PyTorch-style shapes/init ranges)
    word_emb_table = jax.random.normal(ks[0], (word_vocab_size, word_embedding_dim), jnp.float32)
    char_emb_table = jax.random.normal(ks[1], (char_vocab_size, char_embedding_dim), jnp.float32)

    # char LSTM: weight_ih (4H, E), weight_hh (4H, H), bias_ih + bias_hh folded into one (1, 4H)
    wih_c = u(ks[2], (4 * char_hidden_dim, char_embedding_dim), char_hidden_dim)
    whh_c = u(ks[3], (4 * char_hidden_dim, char_hidden_dim), char_hidden_dim)
    b_c = (u(ks[4], (1, 4 * char_hidden_dim), char_hidden_dim)
           + u(ks[5], (1, 4 * char_hidden_dim), char_hidden_dim))

    # word LSTM: input = word_embedding_dim + char_hidden_dim; Wih pre-split by input block
    wih_w_full = u(ks[6], (4 * word_hidden_dim, word_embedding_dim + char_hidden_dim), word_hidden_dim)
    wih_ww = wih_w_full[:, :word_embedding_dim]
    wih_wc = wih_w_full[:, word_embedding_dim:]
    whh_w = u(ks[7], (4 * word_hidden_dim, word_hidden_dim), word_hidden_dim)
    b_w = (u(ks[8], (1, 4 * word_hidden_dim), word_hidden_dim)
           + u(ks[9], (1, 4 * word_hidden_dim), word_hidden_dim))

    # hidden2tag Linear
    w_tag = u(ks[10], (tagset_size, word_hidden_dim), word_hidden_dim)
    b_tag = u(ks[11], (1, tagset_size), word_hidden_dim)

    params = (wih_c, whh_c, b_c, wih_ww, wih_wc, whh_w, b_w, w_tag, b_tag)

    # Deterministic example inputs (index sequences)
    word_sequence = jnp.array([3], dtype=jnp.int32)                                # length 1
    char_sequence = jax.random.randint(jax.random.PRNGKey(42), (char_seq_len,),
                                       0, char_vocab_size, dtype=jnp.int32)

    # Embedding lookups (glue, plain JAX)
    word_embed = word_emb_table[word_sequence]          # (1, E_w)
    char_embeds = char_emb_table[char_sequence]         # (T_char, E_c)

    out = lstm_tagger_plus_forward(char_embeds, word_embed, params)
    out = jax.block_until_ready(out)

    ref = _reference(char_embeds, word_embed, params)
    assert out.shape == (1, tagset_size)
    assert jnp.allclose(out, ref, atol=1e-5, rtol=1e-5), (out, ref)

    print("KERNEL_OK")
</pallas_src>

<mosaic_0001>
module attributes {stable_mosaic.version = 11 : i64} {
  func.func @tagger_kernel(%arg0: memref<8x8xf32, #tpu.memory_space<vmem>>, %arg1: memref<1x16xf32, #tpu.memory_space<vmem>>, %arg2: memref<8x64xf32, #tpu.memory_space<vmem>>, %arg3: memref<16x64xf32, #tpu.memory_space<vmem>>, %arg4: memref<1x64xf32, #tpu.memory_space<vmem>>, %arg5: memref<16x128xf32, #tpu.memory_space<vmem>>, %arg6: memref<16x128xf32, #tpu.memory_space<vmem>>, %arg7: memref<1x128xf32, #tpu.memory_space<vmem>>, %arg8: memref<32x10xf32, #tpu.memory_space<vmem>>, %arg9: memref<1x10xf32, #tpu.memory_space<vmem>>, %arg10: memref<1x10xf32, #tpu.memory_space<vmem>>, %arg11: memref<8x64xf32, #tpu.memory_space<vmem>>) attributes {dimension_semantics = [], scalar_prefetch = 0 : i64, scratch_operands = 1 : i64, tpu.core_type = #tpu.core_type<tc>} {
    %c0 = arith.constant 0 : index
    %c0_0 = arith.constant 0 : index
    %0 = vector.load %arg3[%c0, %c0_0] : memref<16x64xf32, #tpu.memory_space<vmem>>, vector<16x64xf32>
    %c0_1 = arith.constant 0 : index
    %c0_2 = arith.constant 0 : index
    %1 = vector.load %arg0[%c0_1, %c0_2] : memref<8x8xf32, #tpu.memory_space<vmem>>, vector<8x8xf32>
    %c0_3 = arith.constant 0 : index
    %c0_4 = arith.constant 0 : index
    %2 = vector.load %arg2[%c0_3, %c0_4] : memref<8x64xf32, #tpu.memory_space<vmem>>, vector<8x64xf32>
    %cst = arith.constant dense<0.000000e+00> : vector<8x64xf32>
    %3 = tpu.matmul %1, %2, %cst {dimension_numbers = #tpu.dot_dimension_numbers<[1], [0], [0], [1], [0, 0, 1, 1], [], []>} : vector<8x8xf32>, vector<8x64xf32>, vector<8x64xf32> -> vector<8x64xf32>
    %c0_5 = arith.constant 0 : index
    %c0_6 = arith.constant 0 : index
    %4 = vector.load %arg4[%c0_5, %c0_6] : memref<1x64xf32, #tpu.memory_space<vmem>>, vector<1x64xf32>
    %5 = vector.broadcast %4 : vector<1x64xf32> to vector<8x64xf32>
    %6 = arith.addf %3, %5 : vector<8x64xf32>
    %c0_7 = arith.constant 0 : index
    %c0_8 = arith.constant 0 : index
    %7 = vector.load %arg11[%c0_7, %c0_8] : memref<8x64xf32, #tpu.memory_space<vmem>>, vector<8x64xf32>
    tpu.vector_store %arg11[%c0_7, %c0_8], %6 {strides = array<i32>} : memref<8x64xf32, #tpu.memory_space<vmem>>, vector<8x64xf32>,
    %c0_9 = arith.constant 0 : index
    %c0_10 = arith.constant 0 : index
    %8 = vector.load %arg1[%c0_9, %c0_10] : memref<1x16xf32, #tpu.memory_space<vmem>>, vector<1x16xf32>
    %c0_11 = arith.constant 0 : index
    %c0_12 = arith.constant 0 : index
    %9 = vector.load %arg5[%c0_11, %c0_12] : memref<16x128xf32, #tpu.memory_space<vmem>>, vector<16x128xf32>
    %cst_13 = arith.constant dense<0.000000e+00> : vector<1x128xf32>
    %10 = tpu.matmul %8, %9, %cst_13 {dimension_numbers = #tpu.dot_dimension_numbers<[1], [0], [0], [1], [0, 0, 1, 1], [], []>} : vector<1x16xf32>, vector<16x128xf32>, vector<1x128xf32> -> vector<1x128xf32>
    %c0_14 = arith.constant 0 : index
    %c0_15 = arith.constant 0 : index
    %11 = vector.load %arg7[%c0_14, %c0_15] : memref<1x128xf32, #tpu.memory_space<vmem>>, vector<1x128xf32>
    %12 = arith.addf %10, %11 : vector<1x128xf32>
    %cst_16 = arith.constant 0.000000e+00 : f32
    %13 = vector.broadcast %cst_16 : f32 to vector<1x16xf32>
    %cst_17 = arith.constant 0.000000e+00 : f32
    %14 = vector.broadcast %cst_17 : f32 to vector<1x16xf32>
    %c0_i32 = arith.constant 0 : i32
    %15 = arith.index_cast %c0_i32 : i32 to index
    %c0_18 = arith.constant 0 : index
    %16 = vector.load %arg11[%15, %c0_18] : memref<8x64xf32, #tpu.memory_space<vmem>>, vector<1x64xf32>
    %cst_19 = arith.constant dense<0.000000e+00> : vector<1x64xf32>
    %17 = tpu.matmul %13, %0, %cst_19 {dimension_numbers = #tpu.dot_dimension_numbers<[1], [0], [0], [1], [0, 0, 1, 1], [], []>} : vector<1x16xf32>, vector<16x64xf32>, vector<1x64xf32> -> vector<1x64xf32>
    %18 = arith.addf %16, %17 : vector<1x64xf32>
    %19 = arith.negf %18 : vector<1x64xf32>
    %20 = math.exp %19 : vector<1x64xf32>
    %cst_20 = arith.constant 1.000000e+00 : f32
    %21 = vector.broadcast %cst_20 : f32 to vector<1x64xf32>
    %22 = arith.addf %21, %20 : vector<1x64xf32>
    %23 = arith.divf %21, %22 : vector<1x64xf32>
    %24 = math.tanh %18 : vector<1x64xf32>
    %25 = vector.extract_strided_slice %23 {offsets = [0, 0], sizes = [1, 16], strides = [1, 1]} : vector<1x64xf32> to vector<1x16xf32>
    %26 = vector.extract_strided_slice %23 {offsets = [0, 16], sizes = [1, 16], strides = [1, 1]} : vector<1x64xf32> to vector<1x16xf32>
    %27 = vector.extract_strided_slice %24 {offsets = [0, 32], sizes = [1, 16], strides = [1, 1]} : vector<1x64xf32> to vector<1x16xf32>
    %28 = vector.extract_strided_slice %23 {offsets = [0, 48], sizes = [1, 16], strides = [1, 1]} : vector<1x64xf32> to vector<1x16xf32>
    %29 = arith.mulf %26, %14 : vector<1x16xf32>
    %30 = arith.mulf %25, %27 : vector<1x16xf32>
    %31 = arith.addf %29, %30 : vector<1x16xf32>
    %32 = math.tanh %31 : vector<1x16xf32>
    %33 = arith.mulf %28, %32 : vector<1x16xf32>
    %c1_i32 = arith.constant 1 : i32
    %34 = arith.index_cast %c1_i32 : i32 to index
    %c0_21 = arith.constant 0 : index
    %35 = vector.load %arg11[%34, %c0_21] : memref<8x64xf32, #tpu.memory_space<vmem>>, vector<1x64xf32>
    %cst_22 = arith.constant dense<0.000000e+00> : vector<1x64xf32>
    %36 = tpu.matmul %33, %0, %cst_22 {dimension_numbers = #tpu.dot_dimension_numbers<[1], [0], [0], [1], [0, 0, 1, 1], [], []>} : vector<1x16xf32>, vector<16x64xf32>, vector<1x64xf32> -> vector<1x64xf32>
    %37 = arith.addf %35, %36 : vector<1x64xf32>
    %38 = arith.negf %37 : vector<1x64xf32>
    %39 = math.exp %38 : vector<1x64xf32>
    %cst_23 = arith.constant 1.000000e+00 : f32
    %40 = vector.broadcast %cst_23 : f32 to vector<1x64xf32>
    %41 = arith.addf %40, %39 : vector<1x64xf32>
    %42 = arith.divf %40, %41 : vector<1x64xf32>
    %43 = math.tanh %37 : vector<1x64xf32>
    %44 = vector.extract_strided_slice %42 {offsets = [0, 0], sizes = [1, 16], strides = [1, 1]} : vector<1x64xf32> to vector<1x16xf32>
    %45 = vector.extract_strided_slice %42 {offsets = [0, 16], sizes = [1, 16], strides = [1, 1]} : vector<1x64xf32> to vector<1x16xf32>
    %46 = vector.extract_strided_slice %43 {offsets = [0, 32], sizes = [1, 16], strides = [1, 1]} : vector<1x64xf32> to vector<1x16xf32>
    %47 = vector.extract_strided_slice %42 {offsets = [0, 48], sizes = [1, 16], strides = [1, 1]} : vector<1x64xf32> to vector<1x16xf32>
    %48 = arith.mulf %45, %31 : vector<1x16xf32>
    %49 = arith.mulf %44, %46 : vector<1x16xf32>
    %50 = arith.addf %48, %49 : vector<1x16xf32>
    %51 = math.tanh %50 : vector<1x16xf32>
    %52 = arith.mulf %47, %51 : vector<1x16xf32>
    %c2_i32 = arith.constant 2 : i32
    %53 = arith.index_cast %c2_i32 : i32 to index
    %c0_24 = arith.constant 0 : index
    %54 = vector.load %arg11[%53, %c0_24] : memref<8x64xf32, #tpu.memory_space<vmem>>, vector<1x64xf32>
    %cst_25 = arith.constant dense<0.000000e+00> : vector<1x64xf32>
    %55 = tpu.matmul %52, %0, %cst_25 {dimension_numbers = #tpu.dot_dimension_numbers<[1], [0], [0], [1], [0, 0, 1, 1], [], []>} : vector<1x16xf32>, vector<16x64xf32>, vector<1x64xf32> -> vector<1x64xf32>
    %56 = arith.addf %54, %55 : vector<1x64xf32>
    %57 = arith.negf %56 : vector<1x64xf32>
    %58 = math.exp %57 : vector<1x64xf32>
    %cst_26 = arith.constant 1.000000e+00 : f32
    %59 = vector.broadcast %cst_26 : f32 to vector<1x64xf32>
    %60 = arith.addf %59, %58 : vector<1x64xf32>
    %61 = arith.divf %59, %60 : vector<1x64xf32>
    %62 = math.tanh %56 : vector<1x64xf32>
    %63 = vector.extract_strided_slice %61 {offsets = [0, 0], sizes = [1, 16], strides = [1, 1]} : vector<1x64xf32> to vector<1x16xf32>
    %64 = vector.extract_strided_slice %61 {offsets = [0, 16], sizes = [1, 16], strides = [1, 1]} : vector<1x64xf32> to vector<1x16xf32>
    %65 = vector.extract_strided_slice %62 {offsets = [0, 32], sizes = [1, 16], strides = [1, 1]} : vector<1x64xf32> to vector<1x16xf32>
    %66 = vector.extract_strided_slice %61 {offsets = [0, 48], sizes = [1, 16], strides = [1, 1]} : vector<1x64xf32> to vector<1x16xf32>
    %67 = arith.mulf %64, %50 : vector<1x16xf32>
    %68 = arith.mulf %63, %65 : vector<1x16xf32>
    %69 = arith.addf %67, %68 : vector<1x16xf32>
    %70 = math.tanh %69 : vector<1x16xf32>
    %71 = arith.mulf %66, %70 : vector<1x16xf32>
    %c3_i32 = arith.constant 3 : i32
    %72 = arith.index_cast %c3_i32 : i32 to index
    %c0_27 = arith.constant 0 : index
    %73 = vector.load %arg11[%72, %c0_27] : memref<8x64xf32, #tpu.memory_space<vmem>>, vector<1x64xf32>
    %cst_28 = arith.constant dense<0.000000e+00> : vector<1x64xf32>
    %74 = tpu.matmul %71, %0, %cst_28 {dimension_numbers = #tpu.dot_dimension_numbers<[1], [0], [0], [1], [0, 0, 1, 1], [], []>} : vector<1x16xf32>, vector<16x64xf32>, vector<1x64xf32> -> vector<1x64xf32>
    %75 = arith.addf %73, %74 : vector<1x64xf32>
    %76 = arith.negf %75 : vector<1x64xf32>
    %77 = math.exp %76 : vector<1x64xf32>
    %cst_29 = arith.constant 1.000000e+00 : f32
    %78 = vector.broadcast %cst_29 : f32 to vector<1x64xf32>
    %79 = arith.addf %78, %77 : vector<1x64xf32>
    %80 = arith.divf %78, %79 : vector<1x64xf32>
    %81 = math.tanh %75 : vector<1x64xf32>
    %82 = vector.extract_strided_slice %80 {offsets = [0, 0], sizes = [1, 16], strides = [1, 1]} : vector<1x64xf32> to vector<1x16xf32>
    %83 = vector.extract_strided_slice %80 {offsets = [0, 16], sizes = [1, 16], strides = [1, 1]} : vector<1x64xf32> to vector<1x16xf32>
    %84 = vector.extract_strided_slice %81 {offsets = [0, 32], sizes = [1, 16], strides = [1, 1]} : vector<1x64xf32> to vector<1x16xf32>
    %85 = vector.extract_strided_slice %80 {offsets = [0, 48], sizes = [1, 16], strides = [1, 1]} : vector<1x64xf32> to vector<1x16xf32>
    %86 = arith.mulf %83, %69 : vector<1x16xf32>
    %87 = arith.mulf %82, %84 : vector<1x16xf32>
    %88 = arith.addf %86, %87 : vector<1x16xf32>
    %89 = math.tanh %88 : vector<1x16xf32>
    %90 = arith.mulf %85, %89 : vector<1x16xf32>
    %c4_i32 = arith.constant 4 : i32
    %91 = arith.index_cast %c4_i32 : i32 to index
    %c0_30 = arith.constant 0 : index
    %92 = vector.load %arg11[%91, %c0_30] : memref<8x64xf32, #tpu.memory_space<vmem>>, vector<1x64xf32>
    %cst_31 = arith.constant dense<0.000000e+00> : vector<1x64xf32>
    %93 = tpu.matmul %90, %0, %cst_31 {dimension_numbers = #tpu.dot_dimension_numbers<[1], [0], [0], [1], [0, 0, 1, 1], [], []>} : vector<1x16xf32>, vector<16x64xf32>, vector<1x64xf32> -> vector<1x64xf32>
    %94 = arith.addf %92, %93 : vector<1x64xf32>
    %95 = arith.negf %94 : vector<1x64xf32>
    %96 = math.exp %95 : vector<1x64xf32>
    %cst_32 = arith.constant 1.000000e+00 : f32
    %97 = vector.broadcast %cst_32 : f32 to vector<1x64xf32>
    %98 = arith.addf %97, %96 : vector<1x64xf32>
    %99 = arith.divf %97, %98 : vector<1x64xf32>
    %100 = math.tanh %94 : vector<1x64xf32>
    %101 = vector.extract_strided_slice %99 {offsets = [0, 0], sizes = [1, 16], strides = [1, 1]} : vector<1x64xf32> to vector<1x16xf32>
    %102 = vector.extract_strided_slice %99 {offsets = [0, 16], sizes = [1, 16], strides = [1, 1]} : vector<1x64xf32> to vector<1x16xf32>
    %103 = vector.extract_strided_slice %100 {offsets = [0, 32], sizes = [1, 16], strides = [1, 1]} : vector<1x64xf32> to vector<1x16xf32>
    %104 = vector.extract_strided_slice %99 {offsets = [0, 48], sizes = [1, 16], strides = [1, 1]} : vector<1x64xf32> to vector<1x16xf32>
    %105 = arith.mulf %102, %88 : vector<1x16xf32>
    %106 = arith.mulf %101, %103 : vector<1x16xf32>
    %107 = arith.addf %105, %106 : vector<1x16xf32>
    %108 = math.tanh %107 : vector<1x16xf32>
    %109 = arith.mulf %104, %108 : vector<1x16xf32>
    %c5_i32 = arith.constant 5 : i32
    %110 = arith.index_cast %c5_i32 : i32 to index
    %c0_33 = arith.constant 0 : index
    %111 = vector.load %arg11[%110, %c0_33] : memref<8x64xf32, #tpu.memory_space<vmem>>, vector<1x64xf32>
    %cst_34 = arith.constant dense<0.000000e+00> : vector<1x64xf32>
    %112 = tpu.matmul %109, %0, %cst_34 {dimension_numbers = #tpu.dot_dimension_numbers<[1], [0], [0], [1], [0, 0, 1, 1], [], []>} : vector<1x16xf32>, vector<16x64xf32>, vector<1x64xf32> -> vector<1x64xf32>
    %113 = arith.addf %111, %112 : vector<1x64xf32>
    %114 = arith.negf %113 : vector<1x64xf32>
    %115 = math.exp %114 : vector<1x64xf32>
    %cst_35 = arith.constant 1.000000e+00 : f32
    %116 = vector.broadcast %cst_35 : f32 to vector<1x64xf32>
    %117 = arith.addf %116, %115 : vector<1x64xf32>
    %118 = arith.divf %116, %117 : vector<1x64xf32>
    %119 = math.tanh %113 : vector<1x64xf32>
    %120 = vector.extract_strided_slice %118 {offsets = [0, 0], sizes = [1, 16], strides = [1, 1]} : vector<1x64xf32> to vector<1x16xf32>
    %121 = vector.extract_strided_slice %118 {offsets = [0, 16], sizes = [1, 16], strides = [1, 1]} : vector<1x64xf32> to vector<1x16xf32>
    %122 = vector.extract_strided_slice %119 {offsets = [0, 32], sizes = [1, 16], strides = [1, 1]} : vector<1x64xf32> to vector<1x16xf32>
    %123 = vector.extract_strided_slice %118 {offsets = [0, 48], sizes = [1, 16], strides = [1, 1]} : vector<1x64xf32> to vector<1x16xf32>
    %124 = arith.mulf %121, %107 : vector<1x16xf32>
    %125 = arith.mulf %120, %122 : vector<1x16xf32>
    %126 = arith.addf %124, %125 : vector<1x16xf32>
    %127 = math.tanh %126 : vector<1x16xf32>
    %128 = arith.mulf %123, %127 : vector<1x16xf32>
    %c6_i32 = arith.constant 6 : i32
    %129 = arith.index_cast %c6_i32 : i32 to index
    %c0_36 = arith.constant 0 : index
    %130 = vector.load %arg11[%129, %c0_36] : memref<8x64xf32, #tpu.memory_space<vmem>>, vector<1x64xf32>
    %cst_37 = arith.constant dense<0.000000e+00> : vector<1x64xf32>
    %131 = tpu.matmul %128, %0, %cst_37 {dimension_numbers = #tpu.dot_dimension_numbers<[1], [0], [0], [1], [0, 0, 1, 1], [], []>} : vector<1x16xf32>, vector<16x64xf32>, vector<1x64xf32> -> vector<1x64xf32>
    %132 = arith.addf %130, %131 : vector<1x64xf32>
    %133 = arith.negf %132 : vector<1x64xf32>
    %134 = math.exp %133 : vector<1x64xf32>
    %cst_38 = arith.constant 1.000000e+00 : f32
    %135 = vector.broadcast %cst_38 : f32 to vector<1x64xf32>
    %136 = arith.addf %135, %134 : vector<1x64xf32>
    %137 = arith.divf %135, %136 : vector<1x64xf32>
    %138 = math.tanh %132 : vector<1x64xf32>
    %139 = vector.extract_strided_slice %137 {offsets = [0, 0], sizes = [1, 16], strides = [1, 1]} : vector<1x64xf32> to vector<1x16xf32>
    %140 = vector.extract_strided_slice %137 {offsets = [0, 16], sizes = [1, 16], strides = [1, 1]} : vector<1x64xf32> to vector<1x16xf32>
    %141 = vector.extract_strided_slice %138 {offsets = [0, 32], sizes = [1, 16], strides = [1, 1]} : vector<1x64xf32> to vector<1x16xf32>
    %142 = vector.extract_strided_slice %137 {offsets = [0, 48], sizes = [1, 16], strides = [1, 1]} : vector<1x64xf32> to vector<1x16xf32>
    %143 = arith.mulf %140, %126 : vector<1x16xf32>
    %144 = arith.mulf %139, %141 : vector<1x16xf32>
    %145 = arith.addf %143, %144 : vector<1x16xf32>
    %146 = math.tanh %145 : vector<1x16xf32>
    %147 = arith.mulf %142, %146 : vector<1x16xf32>
    %c7_i32 = arith.constant 7 : i32
    %148 = arith.index_cast %c7_i32 : i32 to index
    %c0_39 = arith.constant 0 : index
    %149 = vector.load %arg11[%148, %c0_39] : memref<8x64xf32, #tpu.memory_space<vmem>>, vector<1x64xf32>
    %cst_40 = arith.constant dense<0.000000e+00> : vector<1x64xf32>
    %150 = tpu.matmul %147, %0, %cst_40 {dimension_numbers = #tpu.dot_dimension_numbers<[1], [0], [0], [1], [0, 0, 1, 1], [], []>} : vector<1x16xf32>, vector<16x64xf32>, vector<1x64xf32> -> vector<1x64xf32>
    %151 = arith.addf %149, %150 : vector<1x64xf32>
    %152 = arith.negf %151 : vector<1x64xf32>
    %153 = math.exp %152 : vector<1x64xf32>
    %cst_41 = arith.constant 1.000000e+00 : f32
    %154 = vector.broadcast %cst_41 : f32 to vector<1x64xf32>
    %155 = arith.addf %154, %153 : vector<1x64xf32>
    %156 = arith.divf %154, %155 : vector<1x64xf32>
    %157 = math.tanh %151 : vector<1x64xf32>
    %158 = vector.extract_strided_slice %156 {offsets = [0, 0], sizes = [1, 16], strides = [1, 1]} : vector<1x64xf32> to vector<1x16xf32>
    %159 = vector.extract_strided_slice %156 {offsets = [0, 16], sizes = [1, 16], strides = [1, 1]} : vector<1x64xf32> to vector<1x16xf32>
    %160 = vector.extract_strided_slice %157 {offsets = [0, 32], sizes = [1, 16], strides = [1, 1]} : vector<1x64xf32> to vector<1x16xf32>
    %161 = vector.extract_strided_slice %156 {offsets = [0, 48], sizes = [1, 16], strides = [1, 1]} : vector<1x64xf32> to vector<1x16xf32>
    %162 = arith.mulf %159, %145 : vector<1x16xf32>
    %163 = arith.mulf %158, %160 : vector<1x16xf32>
    %164 = arith.addf %162, %163 : vector<1x16xf32>
    %165 = math.tanh %164 : vector<1x16xf32>
    %166 = arith.mulf %161, %165 : vector<1x16xf32>
    %c8_i32 = arith.constant 8 : i32
    %c0_42 = arith.constant 0 : index
    %c0_43 = arith.constant 0 : index
    %167 = vector.load %arg6[%c0_42, %c0_43] : memref<16x128xf32, #tpu.memory_space<vmem>>, vector<16x128xf32>
    %cst_44 = arith.constant dense<0.000000e+00> : vector<1x128xf32>
    %168 = tpu.matmul %166, %167, %cst_44 {dimension_numbers = #tpu.dot_dimension_numbers<[1], [0], [0], [1], [0, 0, 1, 1], [], []>} : vector<1x16xf32>, vector<16x128xf32>, vector<1x128xf32> -> vector<1x128xf32>
    %169 = arith.addf %12, %168 : vector<1x128xf32>
    %170 = arith.negf %169 : vector<1x128xf32>
    %171 = math.exp %170 : vector<1x128xf32>
    %cst_45 = arith.constant 1.000000e+00 : f32
    %172 = vector.broadcast %cst_45 : f32 to vector<1x128xf32>
    %173 = arith.addf %172, %171 : vector<1x128xf32>
    %174 = arith.divf %172, %173 : vector<1x128xf32>
    %175 = math.tanh %169 : vector<1x128xf32>
    %176 = vector.extract_strided_slice %174 {offsets = [0, 0], sizes = [1, 32], strides = [1, 1]} : vector<1x128xf32> to vector<1x32xf32>
    %177 = vector.extract_strided_slice %175 {offsets = [0, 64], sizes = [1, 32], strides = [1, 1]} : vector<1x128xf32> to vector<1x32xf32>
    %178 = vector.extract_strided_slice %174 {offsets = [0, 96], sizes = [1, 32], strides = [1, 1]} : vector<1x128xf32> to vector<1x32xf32>
    %179 = arith.mulf %176, %177 : vector<1x32xf32>
    %180 = math.tanh %179 : vector<1x32xf32>
    %181 = arith.mulf %178, %180 : vector<1x32xf32>
    %c0_46 = arith.constant 0 : index
    %c0_47 = arith.constant 0 : index
    %182 = vector.load %arg8[%c0_46, %c0_47] : memref<32x10xf32, #tpu.memory_space<vmem>>, vector<32x10xf32>
    %cst_48 = arith.constant dense<0.000000e+00> : vector<1x10xf32>
    %183 = tpu.matmul %181, %182, %cst_48 {dimension_numbers = #tpu.dot_dimension_numbers<[1], [0], [0], [1], [0, 0, 1, 1], [], []>} : vector<1x32xf32>, vector<32x10xf32>, vector<1x10xf32> -> vector<1x10xf32>
    %c0_49 = arith.constant 0 : index
    %c0_50 = arith.constant 0 : index
    %184 = vector.load %arg9[%c0_49, %c0_50] : memref<1x10xf32, #tpu.memory_space<vmem>>, vector<1x10xf32>
    %185 = arith.addf %183, %184 : vector<1x10xf32>
    %cst_51 = arith.constant dense<0xFF800000> : vector<1xf32>
    %186 = vector.multi_reduction <maximumf>, %185, %cst_51 [1] : vector<1x10xf32> to vector<1xf32>
    %187 = vector.shape_cast %186 : vector<1xf32> to vector<1x1xf32>
    %188 = vector.broadcast %187 : vector<1x1xf32> to vector<1x10xf32>
    %189 = arith.subf %185, %188 : vector<1x10xf32>
    %190 = math.exp %189 : vector<1x10xf32>
    %cst_52 = arith.constant dense<0.000000e+00> : vector<1xf32>
    %191 = vector.multi_reduction <add>, %190, %cst_52 [1] : vector<1x10xf32> to vector<1xf32>
    %192 = vector.shape_cast %191 : vector<1xf32> to vector<1x1xf32>
    %193 = math.log %192 : vector<1x1xf32>
    %194 = vector.broadcast %193 : vector<1x1xf32> to vector<1x10xf32>
    %195 = arith.subf %189, %194 : vector<1x10xf32>
    %c0_53 = arith.constant 0 : index
    %c0_54 = arith.constant 0 : index
    %196 = vector.load %arg10[%c0_53, %c0_54] : memref<1x10xf32, #tpu.memory_space<vmem>>, vector<1x10xf32>
    tpu.vector_store %arg10[%c0_53, %c0_54], %195 {strides = array<i32>} : memref<1x10xf32, #tpu.memory_space<vmem>>, vector<1x10xf32>,
    return
  }
}

</mosaic_0001>

<llo_original>
// kernel: tpu_custom_call.1
$region0: #{tpu_custom_call.1}
  #allocation0 [shape = 'u32[]', space=smem, size = 0x4, offset = 0x4, fixed_abs, tag = 'smem constant byte address 0x4 - core index']
  #allocation1 [shape = 'u32[72,128]{1,0:T(1,128)}', space=vmem, size = 0x9000, scoped, tag = 'internal scratch']
  #allocation2 [shape = 'f32[8,64]{1,0:T(8,128)}', space=vmem, size = 0x1000, scoped, tag = 'scratch operand']
  %s0 = inlined_call_operand.hbm [shape: f32[8,8], index: 0, kind: input, shape index: {}]
  %s1 = inlined_call_operand.hbm [shape: f32[1,16], index: 1, kind: input, shape index: {}]
  %s2 = inlined_call_operand.hbm [shape: f32[8,64], index: 2, kind: input, shape index: {}]
  %s3 = inlined_call_operand.vmem [shape: f32[16,64], index: 3, kind: input, shape index: {}]
  %s4 = inlined_call_operand.vmem [shape: f32[1,64], index: 4, kind: input, shape index: {}]
  %s5 = inlined_call_operand.vmem [shape: f32[16,128], index: 5, kind: input, shape index: {}]
  %s6 = inlined_call_operand.vmem [shape: f32[16,128], index: 6, kind: input, shape index: {}]
  %s7 = inlined_call_operand.vmem [shape: f32[1,128], index: 7, kind: input, shape index: {}]
  %s8 = inlined_call_operand.vmem [shape: f32[32,10], index: 8, kind: input, shape index: {}]
  %s9 = inlined_call_operand.vmem [shape: f32[1,10], index: 9, kind: input, shape index: {}]
  %s10 = inlined_call_operand.hbm [shape: f32[1,10], index: 10, kind: output, shape index: {}]
  %s11 = sld [smem:[#allocation0]]
  $region62: #{tpu_custom_call.1} parent=0
    _
  %s13 = ssub.s32 1, %s11
  %s14 = scalar_select 0, %s13, %s11
  $region1: #{tpu_custom_call.1} parent=0
    #allocation3 [shape = 'u8[4096]{0}', space=vmem, size = 0x1000, scoped, tag = 'input window, operand 0, single buffered']
    #allocation4 [shape = 's32[1]{0}', space=sflag, size = 0x4, scoped, tag = 'scoped memory for tpu_custom_call.1']
    #allocation5 [shape = 's32[1]{0}', space=sflag, size = 0x4, scoped, tag = 'scoped memory for tpu_custom_call.1']
    #allocation6 [shape = 'u8[512]{0}', space=vmem, size = 0x400, scoped, tag = 'input window, operand 1, single buffered']
    #allocation7 [shape = 's32[1]{0}', space=sflag, size = 0x4, scoped, tag = 'scoped memory for tpu_custom_call.1']
    #allocation8 [shape = 'u8[4096]{0}', space=vmem, size = 0x1000, scoped, tag = 'input window, operand 2, single buffered']
    #allocation9 [shape = 'u8[512]{0}', space=vmem, size = 0x400, scoped, tag = 'output window, operand 0, single buffered']
    %15 = vsyncpa [#allocation4], 0
    %16 = vsyncpa [#allocation7], 0
    %17 = vsyncpa [#allocation5], 0
    // Predicated region
    $region2: #{tpu_custom_call.1} parent=1 // pred_check
      _
    $region3: #{tpu_custom_call.1} parent=1 // pred_check_branch
      %19 = sbr.rel (0) target = $region5
    $region4: #{tpu_custom_call.1} parent=1 // pred_region
      %21 = vsyncadd [#allocation4], 0
      %s23 = sshll.u32 %s0, 4
      %s24 = int_to_ptr.hbm [resolvable:$true] %s23
      %s25 = sshll.u32 [#allocation3], 4
      %s26 = int_to_ptr.vmem [resolvable:$true] %s25
      %28 = dma.hbm_to_vmem [thread:$0]  %s24, 128, %s26, [#allocation4]
    $region5: #{tpu_custom_call.1} parent=1 // pred_fallthru
      _
    // Predicated region
    $region6: #{tpu_custom_call.1} parent=1 // pred_check
      _
    $region7: #{tpu_custom_call.1} parent=1 // pred_check_branch
      %30 = sbr.rel (0) target = $region9
    $region8: #{tpu_custom_call.1} parent=1 // pred_region
      %32 = vsyncadd [#allocation7], 0
      %s34 = sshll.u32 %s1, 4
      %s35 = int_to_ptr.hbm [resolvable:$true] %s34
      %s36 = sshll.u32 [#allocation6], 4
      %s37 = int_to_ptr.vmem [resolvable:$true] %s36
      %39 = dma.hbm_to_vmem [thread:$0]  %s35, 16, %s37, [#allocation7]
    $region9: #{tpu_custom_call.1} parent=1 // pred_fallthru
      _
    // Predicated region
    $region10: #{tpu_custom_call.1} parent=1 // pred_check
      _
    $region11: #{tpu_custom_call.1} parent=1 // pred_check_branch
      %41 = sbr.rel (0) target = $region13
    $region12: #{tpu_custom_call.1} parent=1 // pred_region
      %43 = vsyncadd [#allocation7], 0
      %s45 = sshll.u32 %s2, 4
      %s46 = int_to_ptr.hbm [resolvable:$true] %s45
      %s47 = sshll.u32 [#allocation8], 4
      %s48 = int_to_ptr.vmem [resolvable:$true] %s47
      %50 = dma.hbm_to_vmem [thread:$0]  %s46, 128, %s48, [#allocation7]
    $region13: #{tpu_custom_call.1} parent=1 // pred_fallthru
      _
    // Predicated region
    $region14: #{tpu_custom_call.1} parent=1 // pred_check
      _
    $region15: #{tpu_custom_call.1} parent=1 // pred_check_branch
      %52 = sbr.rel (0) target = $region17
    $region16: #{tpu_custom_call.1} parent=1 // pred_region
      _
    $region17: #{tpu_custom_call.1} parent=1 // pred_fallthru
      _
    // Predicated region
    $region18: #{tpu_custom_call.1} parent=1 // pred_check
      _
    $region19: #{tpu_custom_call.1} parent=1 // pred_check_branch
      %54 = sbr.rel (0) target = $region21
    $region20: #{tpu_custom_call.1} parent=1 // pred_region
      _
    $region21: #{tpu_custom_call.1} parent=1 // pred_fallthru
      _
    // Predicated region
    $region22: #{tpu_custom_call.1} parent=1 // pred_check
      _
    $region23: #{tpu_custom_call.1} parent=1 // pred_check_branch
      %56 = sbr.rel (0) target = $region25
    $region24: #{tpu_custom_call.1} parent=1 // pred_region
      _
    $region25: #{tpu_custom_call.1} parent=1 // pred_fallthru
      _
    // Predicated region
    $region26: #{tpu_custom_call.1} parent=1 // pred_check
      _
    $region27: #{tpu_custom_call.1} parent=1 // pred_check_branch
      %58 = sbr.rel (0) target = $region29
    $region28: #{tpu_custom_call.1} parent=1 // pred_region
      _
    $region29: #{tpu_custom_call.1} parent=1 // pred_fallthru
      _
    // Predicated region
    $region30: #{tpu_custom_call.1} parent=1 // pred_check
      _
    $region31: #{tpu_custom_call.1} parent=1 // pred_check_branch
      %60 = sbr.rel (0) target = $region33
    $region32: #{tpu_custom_call.1} parent=1 // pred_region
      _
    $region33: #{tpu_custom_call.1} parent=1 // pred_fallthru
      _
    // Predicated region
    $region34: #{tpu_custom_call.1} parent=1 // pred_check
      _
    $region35: #{tpu_custom_call.1} parent=1 // pred_check_branch
      %62 = sbr.rel (0) target = $region37
    $region36: #{tpu_custom_call.1} parent=1 // pred_region
      _
    $region37: #{tpu_custom_call.1} parent=1 // pred_fallthru
      _
    // Predicated region
    $region38: #{tpu_custom_call.1} parent=1 // pred_check
      _
    $region39: #{tpu_custom_call.1} parent=1 // pred_check_branch
      %64 = sbr.rel (0) target = $region41
    $region40: #{tpu_custom_call.1} parent=1 // pred_region
      _
    $region41: #{tpu_custom_call.1} parent=1 // pred_fallthru
      _
    // Predicated region
    $region42: #{tpu_custom_call.1} parent=1 // pred_check
      _
    $region43: #{tpu_custom_call.1} parent=1 // pred_check_branch
      %66 = sbr.rel (0) target = $region45
    $region44: #{tpu_custom_call.1} parent=1 // pred_region
      %68 = dma.done [#allocation4], 128
    $region45: #{tpu_custom_call.1} parent=1 // pred_fallthru
      _
    // Predicated region
    $region46: #{tpu_custom_call.1} parent=1 // pred_check
      _
    $region47: #{tpu_custom_call.1} parent=1 // pred_check_branch
      %70 = sbr.rel (0) target = $region49
    $region48: #{tpu_custom_call.1} parent=1 // pred_region
      %72 = dma.done [#allocation7], 16
    $region49: #{tpu_custom_call.1} parent=1 // pred_fallthru
      _
    // Predicated region
    $region50: #{tpu_custom_call.1} parent=1 // pred_check
      _
    $region51: #{tpu_custom_call.1} parent=1 // pred_check_branch
      %74 = sbr.rel (0) target = $region53
    $region52: #{tpu_custom_call.1} parent=1 // pred_region
      %76 = dma.done [#allocation7], 128
    $region53: #{tpu_custom_call.1} parent=1 // pred_fallthru
      _
    %v77 = vld [vmem:[%s3] sm:$0xff]
    %v78 = vld [vmem:[%s3 + $0x8] sm:$0xff]
    %v79 = vld [vmem:[#allocation3] sm:$0xff]
    %v80 = vld [vmem:[#allocation8] sm:$0xff]
    %v81 = vld [vmem:[%s4] sm:$0x1]
    %v83 = vperm.slane %v81, 0
    %vm85 = vcmask 64512
    %v87 = vsel %vm85, %v79, 0
    %89 = vmatpush.msra.mxu0 0.0
    %90 = vmatpush.msra.mxu0 0.0
    %91 = vmatpush.msra.mxu0 0.0
    %92 = vmatpush.msra.mxu0 0.0
    %93 = vmatpush.msra.mxu0 0.0
    %94 = vmatpush.msra.mxu0 0.0
    %95 = vmatpush.msra.mxu0 0.0
    %96 = vmatpush.msra.mxu0 0.0
    %97 = vmatpush.msra.mxu0 0.0
    %98 = vmatpush.msra.mxu0 0.0
    %99 = vmatpush.msra.mxu0 0.0
    %100 = vmatpush.msra.mxu0 0.0
    %101 = vmatpush.msra.mxu0 0.0
    %102 = vmatpush.msra.mxu0 0.0
    %103 = vmatpush.msra.mxu0 0.0
    %104 = vmatpush.msra.mxu0 %v80
    %105 = vmatmul.f32.gmra.mxu0 %v87
    %v106 = vpop.f32.mrf.mxu0
    %v107 = vadd.f32 %v83, %v106
    %108 = vdwg.mxu0
    %vm109 = vcmask 523264
    %110 = vst.msk [vmem:[#allocation2] sm:$0xff] %vm109, %v107
    %v111 = vld [vmem:[#allocation6] sm:$0x1]
    %v112 = vld [vmem:[%s5] sm:$0xff]
    %v113 = vld [vmem:[%s5 + $0x8] sm:$0xff]
    %v114 = vld [vmem:[%s7] sm:$0x1]
    %vm115 = vcmask 130048
    %v117 = vsel %vm115, %v111, 0
    %119 = vmatpush.msra.mxu0 0.0
    %120 = vmatpush.msra.mxu0 0.0
    %121 = vmatpush.msra.mxu0 0.0
    %122 = vmatpush.msra.mxu0 0.0
    %123 = vmatpush.msra.mxu0 0.0
    %124 = vmatpush.msra.mxu0 0.0
    %125 = vmatpush.msra.mxu0 0.0
    %126 = vmatpush.msra.mxu0 0.0
    %127 = vmatpush.msra.mxu0 0.0
    %128 = vmatpush.msra.mxu0 0.0
    %129 = vmatpush.msra.mxu0 0.0
    %130 = vmatpush.msra.mxu0 0.0
    %131 = vmatpush.msra.mxu0 0.0
    %132 = vmatpush.msra.mxu0 0.0
    %133 = vmatpush.msra.mxu0 %v113
    %134 = vmatpush.msra.mxu0 %v112
    %135 = vmatmul.f32.gmra.mxu0 %v117
    %v136 = vpop.f32.mrf.mxu0
    %v137 = vadd.f32 %v114, %v136
    %138 = vdwg.mxu0
    %v139 = vld [vmem:[#allocation2] sm:$0x1]
    %v141 = vsel %vm115, 0.0, 0
    %143 = vmatpush.msra.mxu0 0.0
    %144 = vmatpush.msra.mxu0 0.0
    %145 = vmatpush.msra.mxu0 0.0
    %146 = vmatpush.msra.mxu0 0.0
    %147 = vmatpush.msra.mxu0 0.0
    %148 = vmatpush.msra.mxu0 0.0
    %149 = vmatpush.msra.mxu0 0.0
    %150 = vmatpush.msra.mxu0 0.0
    %151 = vmatpush.msra.mxu0 0.0
    %152 = vmatpush.msra.mxu0 0.0
    %153 = vmatpush.msra.mxu0 0.0
    %154 = vmatpush.msra.mxu0 0.0
    %155 = vmatpush.msra.mxu0 0.0
    %156 = vmatpush.msra.mxu0 0.0
    %157 = vmatpush.msra.mxu0 %v78
    %158 = vmatpush.msra.mxu0 %v77
    %159 = vmatmul.f32.gmra.mxu0 %v141
    %v160 = vpop.f32.mrf.mxu0
    %v161 = vadd.f32 0.0, %v160
    %162 = vdwg.mxu0
    %v163 = vadd.f32 %v139, %v161
    %v164 = vxor.u32 %v163, 2147483648
    %v165 = vmul.f32 %v164, 1.442695
    %v166 = vpow.pop %v165
    %v167 = vadd.f32 %v166, 1.0
    %v168 = vrcp.pop %v167
    %v169 = vmul.f32 %v167, %v168
    %v170 = vsub.f32 1.0, %v169
    %v171 = vmul.f32 %v168, %v170
    %v172 = vadd.f32 %v168, %v171
    %vm173 = vweird.f32 %v167
    %vm174 = vweird.f32 %v168
    %vm175 = vmor %vm173, %vm174
    %v176 = vsel %vm175, %v168, %v172
    %v177 = vand.u32 2147483647, %v167
    %vm178 = vcmp.eq.f32.partialorder %v177, 8.507059e+37
    %v179 = vand.u32 %v167, 2147483648
    %v180 = vor.u32 1.1754944e-38, %v179
    %v181 = vsel %vm178, %v180, %v176
    %v182 = vmul.f32 1.0, %v181
    %v183 = vtanh.pop %v163
    %v184 = vmul.f32 %v182, 0.0
    %186 = vrot.lane.b32.xlu0 %v183, 96
    %v187 = vpop.permute.xlu0 %186
    %v189 = vmul.f32 %v182, %v187
    %191 = vrot.lane.b32.xlu0 %v189, 16
    %v192 = vpop.permute.xlu0 %191
    %v194 = vadd.f32 %v184, %v192
    %v195 = vtanh.pop %v194
    %197 = vrot.lane.b32.xlu0 %v195, 32
    %v198 = vpop.permute.xlu0 %197
    %v200 = vmul.f32 %v182, %v198
    %v201 = vld [vmem:[#allocation2 + $0x1] sm:$0x1]
    %203 = vrot.lane.b32.xlu0 %v200, 80
    %v204 = vpop.permute.xlu0 %203
    %v205 = vsel %vm115, %v204, 0
    %207 = vmatpush.msra.mxu0 0.0
    %208 = vmatpush.msra.mxu0 0.0
    %209 = vmatpush.msra.mxu0 0.0
    %210 = vmatpush.msra.mxu0 0.0
    %211 = vmatpush.msra.mxu0 0.0
    %212 = vmatpush.msra.mxu0 0.0
    %213 = vmatpush.msra.mxu0 0.0
    %214 = vmatpush.msra.mxu0 0.0
    %215 = vmatpush.msra.mxu0 0.0
    %216 = vmatpush.msra.mxu0 0.0
    %217 = vmatpush.msra.mxu0 0.0
    %218 = vmatpush.msra.mxu0 0.0
    %219 = vmatpush.msra.mxu0 0.0
    %220 = vmatpush.msra.mxu0 0.0
    %221 = vmatpush.msra.mxu0 %v78
    %222 = vmatpush.msra.mxu0 %v77
    %223 = vmatmul.f32.gmra.mxu0 %v205
    %v224 = vpop.f32.mrf.mxu0
    %v225 = vadd.f32 0.0, %v224
    %226 = vdwg.mxu0
    %v227 = vadd.f32 %v201, %v225
    %v228 = vxor.u32 %v227, 2147483648
    %v229 = vmul.f32 %v228, 1.442695
    %v230 = vpow.pop %v229
    %v231 = vadd.f32 %v230, 1.0
    %v232 = vrcp.pop %v231
    %v233 = vmul.f32 %v231, %v232
    %v234 = vsub.f32 1.0, %v233
    %v235 = vmul.f32 %v232, %v234
    %v236 = vadd.f32 %v232, %v235
    %vm237 = vweird.f32 %v231
    %vm238 = vweird.f32 %v232
    %vm239 = vmor %vm237, %vm238
    %v240 = vsel %vm239, %v232, %v236
    %v241 = vand.u32 2147483647, %v231
    %vm242 = vcmp.eq.f32.partialorder %v241, 8.507059e+37
    %v243 = vand.u32 %v231, 2147483648
    %v244 = vor.u32 1.1754944e-38, %v243
    %v245 = vsel %vm242, %v244, %v240
    %v246 = vmul.f32 1.0, %v245
    %v247 = vtanh.pop %v227
    %v248 = vmul.f32 %v246, %v194
    %250 = vrot.lane.b32.xlu0 %v247, 96
    %v251 = vpop.permute.xlu0 %250
    %v253 = vmul.f32 %v246, %v251
    %255 = vrot.lane.b32.xlu0 %v253, 16
    %v256 = vpop.permute.xlu0 %255
    %v258 = vadd.f32 %v248, %v256
    %v259 = vtanh.pop %v258
    %261 = vrot.lane.b32.xlu0 %v259, 32
    %v262 = vpop.permute.xlu0 %261
    %v264 = vmul.f32 %v246, %v262
    %v265 = vld [vmem:[#allocation2 + $0x2] sm:$0x1]
    %267 = vrot.lane.b32.xlu0 %v264, 80
    %v268 = vpop.permute.xlu0 %267
    %v269 = vsel %vm115, %v268, 0
    %271 = vmatpush.msra.mxu0 0.0
    %272 = vmatpush.msra.mxu0 0.0
    %273 = vmatpush.msra.mxu0 0.0
    %274 = vmatpush.msra.mxu0 0.0
    %275 = vmatpush.msra.mxu0 0.0
    %276 = vmatpush.msra.mxu0 0.0
    %277 = vmatpush.msra.mxu0 0.0
    %278 = vmatpush.msra.mxu0 0.0
    %279 = vmatpush.msra.mxu0 0.0
    %280 = vmatpush.msra.mxu0 0.0
    %281 = vmatpush.msra.mxu0 0.0
    %282 = vmatpush.msra.mxu0 0.0
    %283 = vmatpush.msra.mxu0 0.0
    %284 = vmatpush.msra.mxu0 0.0
    %285 = vmatpush.msra.mxu0 %v78
    %286 = vmatpush.msra.mxu0 %v77
    %287 = vmatmul.f32.gmra.mxu0 %v269
    %v288 = vpop.f32.mrf.mxu0
    %v289 = vadd.f32 0.0, %v288
    %290 = vdwg.mxu0
    %v291 = vadd.f32 %v265, %v289
    %v292 = vxor.u32 %v291, 2147483648
    %v293 = vmul.f32 %v292, 1.442695
    %v294 = vpow.pop %v293
    %v295 = vadd.f32 %v294, 1.0
    %v296 = vrcp.pop %v295
    %v297 = vmul.f32 %v295, %v296
    %v298 = vsub.f32 1.0, %v297
    %v299 = vmul.f32 %v296, %v298
    %v300 = vadd.f32 %v296, %v299
    %vm301 = vweird.f32 %v295
    %vm302 = vweird.f32 %v296
    %vm303 = vmor %vm301, %vm302
    %v304 = vsel %vm303, %v296, %v300
    %v305 = vand.u32 2147483647, %v295
    %vm306 = vcmp.eq.f32.partialorder %v305, 8.507059e+37
    %v307 = vand.u32 %v295, 2147483648
    %v308 = vor.u32 1.1754944e-38, %v307
    %v309 = vsel %vm306, %v308, %v304
    %v310 = vmul.f32 1.0, %v309
    %v311 = vtanh.pop %v291
    %v312 = vmul.f32 %v310, %v258
    %314 = vrot.lane.b32.xlu0 %v311, 96
    %v315 = vpop.permute.xlu0 %314
    %v317 = vmul.f32 %v310, %v315
    %319 = vrot.lane.b32.xlu0 %v317, 16
    %v320 = vpop.permute.xlu0 %319
    %v322 = vadd.f32 %v312, %v320
    %v323 = vtanh.pop %v322
    %325 = vrot.lane.b32.xlu0 %v323, 32
    %v326 = vpop.permute.xlu0 %325
    %v328 = vmul.f32 %v310, %v326
    %v329 = vld [vmem:[#allocation2 + $0x3] sm:$0x1]
    %331 = vrot.lane.b32.xlu0 %v328, 80
    %v332 = vpop.permute.xlu0 %331
    %v333 = vsel %vm115, %v332, 0
    %335 = vmatpush.msra.mxu0 0.0
    %336 = vmatpush.msra.mxu0 0.0
    %337 = vmatpush.msra.mxu0 0.0
    %338 = vmatpush.msra.mxu0 0.0
    %339 = vmatpush.msra.mxu0 0.0
    %340 = vmatpush.msra.mxu0 0.0
    %341 = vmatpush.msra.mxu0 0.0
    %342 = vmatpush.msra.mxu0 0.0
    %343 = vmatpush.msra.mxu0 0.0
    %344 = vmatpush.msra.mxu0 0.0
    %345 = vmatpush.msra.mxu0 0.0
    %346 = vmatpush.msra.mxu0 0.0
    %347 = vmatpush.msra.mxu0 0.0
    %348 = vmatpush.msra.mxu0 0.0
    %349 = vmatpush.msra.mxu0 %v78
    %350 = vmatpush.msra.mxu0 %v77
    %351 = vmatmul.f32.gmra.mxu0 %v333
    %v352 = vpop.f32.mrf.mxu0
    %v353 = vadd.f32 0.0, %v352
    %354 = vdwg.mxu0
    %v355 = vadd.f32 %v329, %v353
    %v356 = vxor.u32 %v355, 2147483648
    %v357 = vmul.f32 %v356, 1.442695
    %v358 = vpow.pop %v357
    %v359 = vadd.f32 %v358, 1.0
    %v360 = vrcp.pop %v359
    %v361 = vmul.f32 %v359, %v360
    %v362 = vsub.f32 1.0, %v361
    %v363 = vmul.f32 %v360, %v362
    %v364 = vadd.f32 %v360, %v363
    %vm365 = vweird.f32 %v359
    %vm366 = vweird.f32 %v360
    %vm367 = vmor %vm365, %vm366
    %v368 = vsel %vm367, %v360, %v364
    %v369 = vand.u32 2147483647, %v359
    %vm370 = vcmp.eq.f32.partialorder %v369, 8.507059e+37
    %v371 = vand.u32 %v359, 2147483648
    %v372 = vor.u32 1.1754944e-38, %v371
    %v373 = vsel %vm370, %v372, %v368
    %v374 = vmul.f32 1.0, %v373
    %v375 = vtanh.pop %v355
    %v376 = vmul.f32 %v374, %v322
    %378 = vrot.lane.b32.xlu0 %v375, 96
    %v379 = vpop.permute.xlu0 %378
    %v381 = vmul.f32 %v374, %v379
    %383 = vrot.lane.b32.xlu0 %v381, 16
    %v384 = vpop.permute.xlu0 %383
    %v386 = vadd.f32 %v376, %v384
    %v387 = vtanh.pop %v386
    %389 = vrot.lane.b32.xlu0 %v387, 32
    %v390 = vpop.permute.xlu0 %389
    %v392 = vmul.f32 %v374, %v390
    %v393 = vld [vmem:[#allocation2 + $0x4] sm:$0x1]
    %395 = vrot.lane.b32.xlu0 %v392, 80
    %v396 = vpop.permute.xlu0 %395
    %v397 = vsel %vm115, %v396, 0
    %399 = vmatpush.msra.mxu0 0.0
    %400 = vmatpush.msra.mxu0 0.0
    %401 = vmatpush.msra.mxu0 0.0
    %402 = vmatpush.msra.mxu0 0.0
    %403 = vmatpush.msra.mxu0 0.0
    %404 = vmatpush.msra.mxu0 0.0
    %405 = vmatpush.msra.mxu0 0.0
    %406 = vmatpush.msra.mxu0 0.0
    %407 = vmatpush.msra.mxu0 0.0
    %408 = vmatpush.msra.mxu0 0.0
    %409 = vmatpush.msra.mxu0 0.0
    %410 = vmatpush.msra.mxu0 0.0
    %411 = vmatpush.msra.mxu0 0.0
    %412 = vmatpush.msra.mxu0 0.0
    %413 = vmatpush.msra.mxu0 %v78
    %414 = vmatpush.msra.mxu0 %v77
    %415 = vmatmul.f32.gmra.mxu0 %v397
    %v416 = vpop.f32.mrf.mxu0
    %v417 = vadd.f32 0.0, %v416
    %418 = vdwg.mxu0
    %v419 = vadd.f32 %v393, %v417
    %v420 = vxor.u32 %v419, 2147483648
    %v421 = vmul.f32 %v420, 1.442695
    %v422 = vpow.pop %v421
    %v423 = vadd.f32 %v422, 1.0
    %v424 = vrcp.pop %v423
    %v425 = vmul.f32 %v423, %v424
    %v426 = vsub.f32 1.0, %v425
    %v427 = vmul.f32 %v424, %v426
    %v428 = vadd.f32 %v424, %v427
    %vm429 = vweird.f32 %v423
    %vm430 = vweird.f32 %v424
    %vm431 = vmor %vm429, %vm430
    %v432 = vsel %vm431, %v424, %v428
    %v433 = vand.u32 2147483647, %v423
    %vm434 = vcmp.eq.f32.partialorder %v433, 8.507059e+37
    %v435 = vand.u32 %v423, 2147483648
    %v436 = vor.u32 1.1754944e-38, %v435
    %v437 = vsel %vm434, %v436, %v432
    %v438 = vmul.f32 1.0, %v437
    %v439 = vtanh.pop %v419
    %v440 = vmul.f32 %v438, %v386
    %442 = vrot.lane.b32.xlu0 %v439, 96
    %v443 = vpop.permute.xlu0 %442
    %v445 = vmul.f32 %v438, %v443
    %447 = vrot.lane.b32.xlu0 %v445, 16
    %v448 = vpop.permute.xlu0 %447
    %v450 = vadd.f32 %v440, %v448
    %v451 = vtanh.pop %v450
    %453 = vrot.lane.b32.xlu0 %v451, 32
    %v454 = vpop.permute.xlu0 %453
    %v456 = vmul.f32 %v438, %v454
    %v457 = vld [vmem:[#allocation2 + $0x5] sm:$0x1]
    %459 = vrot.lane.b32.xlu0 %v456, 80
    %v460 = vpop.permute.xlu0 %459
    %v461 = vsel %vm115, %v460, 0
    %463 = vmatpush.msra.mxu0 0.0
    %464 = vmatpush.msra.mxu0 0.0
    %465 = vmatpush.msra.mxu0 0.0
    %466 = vmatpush.msra.mxu0 0.0
    %467 = vmatpush.msra.mxu0 0.0
    %468 = vmatpush.msra.mxu0 0.0
    %469 = vmatpush.msra.mxu0 0.0
    %470 = vmatpush.msra.mxu0 0.0
    %471 = vmatpush.msra.mxu0 0.0
    %472 = vmatpush.msra.mxu0 0.0
    %473 = vmatpush.msra.mxu0 0.0
    %474 = vmatpush.msra.mxu0 0.0
    %475 = vmatpush.msra.mxu0 0.0
    %476 = vmatpush.msra.mxu0 0.0
    %477 = vmatpush.msra.mxu0 %v78
    %478 = vmatpush.msra.mxu0 %v77
    %479 = vmatmul.f32.gmra.mxu0 %v461
    %v480 = vpop.f32.mrf.mxu0
    %v481 = vadd.f32 0.0, %v480
    %482 = vdwg.mxu0
    %v483 = vadd.f32 %v457, %v481
    %v484 = vxor.u32 %v483, 2147483648
    %v485 = vmul.f32 %v484, 1.442695
    %v486 = vpow.pop %v485
    %v487 = vadd.f32 %v486, 1.0
    %v488 = vrcp.pop %v487
    %v489 = vmul.f32 %v487, %v488
    %v490 = vsub.f32 1.0, %v489
    %v491 = vmul.f32 %v488, %v490
    %v492 = vadd.f32 %v488, %v491
    %vm493 = vweird.f32 %v487
    %vm494 = vweird.f32 %v488
    %vm495 = vmor %vm493, %vm494
    %v496 = vsel %vm495, %v488, %v492
    %v497 = vand.u32 2147483647, %v487
    %vm498 = vcmp.eq.f32.partialorder %v497, 8.507059e+37
    %v499 = vand.u32 %v487, 2147483648
    %v500 = vor.u32 1.1754944e-38, %v499
    %v501 = vsel %vm498, %v500, %v496
    %v502 = vmul.f32 1.0, %v501
    %v503 = vtanh.pop %v483
    %v504 = vmul.f32 %v502, %v450
    %506 = vrot.lane.b32.xlu0 %v503, 96
    %v507 = vpop.permute.xlu0 %506
    %v509 = vmul.f32 %v502, %v507
    %511 = vrot.lane.b32.xlu0 %v509, 16
    %v512 = vpop.permute.xlu0 %511
    %v514 = vadd.f32 %v504, %v512
    %v515 = vtanh.pop %v514
    %517 = vrot.lane.b32.xlu0 %v515, 32
    %v518 = vpop.permute.xlu0 %517
    %v520 = vmul.f32 %v502, %v518
    %v521 = vld [vmem:[#allocation2 + $0x6] sm:$0x1]
    %523 = vrot.lane.b32.xlu0 %v520, 80
    %v524 = vpop.permute.xlu0 %523
    %v525 = vsel %vm115, %v524, 0
    %527 = vmatpush.msra.mxu0 0.0
    %528 = vmatpush.msra.mxu0 0.0
    %529 = vmatpush.msra.mxu0 0.0
    %530 = vmatpush.msra.mxu0 0.0
    %531 = vmatpush.msra.mxu0 0.0
    %532 = vmatpush.msra.mxu0 0.0
    %533 = vmatpush.msra.mxu0 0.0
    %534 = vmatpush.msra.mxu0 0.0
    %535 = vmatpush.msra.mxu0 0.0
    %536 = vmatpush.msra.mxu0 0.0
    %537 = vmatpush.msra.mxu0 0.0
    %538 = vmatpush.msra.mxu0 0.0
    %539 = vmatpush.msra.mxu0 0.0
    %540 = vmatpush.msra.mxu0 0.0
    %541 = vmatpush.msra.mxu0 %v78
    %542 = vmatpush.msra.mxu0 %v77
    %543 = vmatmul.f32.gmra.mxu0 %v525
    %v544 = vpop.f32.mrf.mxu0
    %v545 = vadd.f32 0.0, %v544
    %546 = vdwg.mxu0
    %v547 = vadd.f32 %v521, %v545
    %v548 = vxor.u32 %v547, 2147483648
    %v549 = vmul.f32 %v548, 1.442695
    %v550 = vpow.pop %v549
    %v551 = vadd.f32 %v550, 1.0
    %v552 = vrcp.pop %v551
    %v553 = vmul.f32 %v551, %v552
    %v554 = vsub.f32 1.0, %v553
    %v555 = vmul.f32 %v552, %v554
    %v556 = vadd.f32 %v552, %v555
    %vm557 = vweird.f32 %v551
    %vm558 = vweird.f32 %v552
    %vm559 = vmor %vm557, %vm558
    %v560 = vsel %vm559, %v552, %v556
    %v561 = vand.u32 2147483647, %v551
    %vm562 = vcmp.eq.f32.partialorder %v561, 8.507059e+37
    %v563 = vand.u32 %v551, 2147483648
    %v564 = vor.u32 1.1754944e-38, %v563
    %v565 = vsel %vm562, %v564, %v560
    %v566 = vmul.f32 1.0, %v565
    %v567 = vtanh.pop %v547
    %v568 = vmul.f32 %v566, %v514
    %570 = vrot.lane.b32.xlu0 %v567, 96
    %v571 = vpop.permute.xlu0 %570
    %v573 = vmul.f32 %v566, %v571
    %575 = vrot.lane.b32.xlu0 %v573, 16
    %v576 = vpop.permute.xlu0 %575
    %v578 = vadd.f32 %v568, %v576
    %v579 = vtanh.pop %v578
    %581 = vrot.lane.b32.xlu0 %v579, 32
    %v582 = vpop.permute.xlu0 %581
    %v584 = vmul.f32 %v566, %v582
    %v585 = vld [vmem:[#allocation2 + $0x7] sm:$0x1]
    %587 = vrot.lane.b32.xlu0 %v584, 80
    %v588 = vpop.permute.xlu0 %587
    %v589 = vsel %vm115, %v588, 0
    %591 = vmatpush.msra.mxu0 0.0
    %592 = vmatpush.msra.mxu0 0.0
    %593 = vmatpush.msra.mxu0 0.0
    %594 = vmatpush.msra.mxu0 0.0
    %595 = vmatpush.msra.mxu0 0.0
    %596 = vmatpush.msra.mxu0 0.0
    %597 = vmatpush.msra.mxu0 0.0
    %598 = vmatpush.msra.mxu0 0.0
    %599 = vmatpush.msra.mxu0 0.0
    %600 = vmatpush.msra.mxu0 0.0
    %601 = vmatpush.msra.mxu0 0.0
    %602 = vmatpush.msra.mxu0 0.0
    %603 = vmatpush.msra.mxu0 0.0
    %604 = vmatpush.msra.mxu0 0.0
    %605 = vmatpush.msra.mxu0 %v78
    %606 = vmatpush.msra.mxu0 %v77
    %607 = vmatmul.f32.gmra.mxu0 %v589
    %v608 = vpop.f32.mrf.mxu0
    %v609 = vadd.f32 0.0, %v608
    %610 = vdwg.mxu0
    %v611 = vadd.f32 %v585, %v609
    %v612 = vxor.u32 %v611, 2147483648
    %v613 = vmul.f32 %v612, 1.442695
    %v614 = vpow.pop %v613
    %v615 = vadd.f32 %v614, 1.0
    %v616 = vrcp.pop %v615
    %v617 = vmul.f32 %v615, %v616
    %v618 = vsub.f32 1.0, %v617
    %v619 = vmul.f32 %v616, %v618
    %v620 = vadd.f32 %v616, %v619
    %vm621 = vweird.f32 %v615
    %vm622 = vweird.f32 %v616
    %vm623 = vmor %vm621, %vm622
    %v624 = vsel %vm623, %v616, %v620
    %v625 = vand.u32 2147483647, %v615
    %vm626 = vcmp.eq.f32.partialorder %v625, 8.507059e+37
    %v627 = vand.u32 %v615, 2147483648
    %v628 = vor.u32 1.1754944e-38, %v627
    %v629 = vsel %vm626, %v628, %v624
    %v630 = vmul.f32 1.0, %v629
    %v631 = vtanh.pop %v611
    %v632 = vmul.f32 %v630, %v578
    %634 = vrot.lane.b32.xlu0 %v631, 96
    %v635 = vpop.permute.xlu0 %634
    %v637 = vmul.f32 %v630, %v635
    %639 = vrot.lane.b32.xlu0 %v637, 16
    %v640 = vpop.permute.xlu0 %639
    %v642 = vadd.f32 %v632, %v640
    %v643 = vtanh.pop %v642
    %645 = vrot.lane.b32.xlu0 %v643, 32
    %v646 = vpop.permute.xlu0 %645
    %v648 = vmul.f32 %v630, %v646
    %v649 = vld [vmem:[%s6] sm:$0xff]
    %v650 = vld [vmem:[%s6 + $0x8] sm:$0xff]
    %652 = vrot.lane.b32.xlu0 %v648, 80
    %v653 = vpop.permute.xlu0 %652
    %v654 = vsel %vm115, %v653, 0
    %656 = vmatpush.msra.mxu0 0.0
    %657 = vmatpush.msra.mxu0 0.0
    %658 = vmatpush.msra.mxu0 0.0
    %659 = vmatpush.msra.mxu0 0.0
    %660 = vmatpush.msra.mxu0 0.0
    %661 = vmatpush.msra.mxu0 0.0
    %662 = vmatpush.msra.mxu0 0.0
    %663 = vmatpush.msra.mxu0 0.0
    %664 = vmatpush.msra.mxu0 0.0
    %665 = vmatpush.msra.mxu0 0.0
    %666 = vmatpush.msra.mxu0 0.0
    %667 = vmatpush.msra.mxu0 0.0
    %668 = vmatpush.msra.mxu0 0.0
    %669 = vmatpush.msra.mxu0 0.0
    %670 = vmatpush.msra.mxu0 %v650
    %671 = vmatpush.msra.mxu0 %v649
    %672 = vmatmul.f32.gmra.mxu0 %v654
    %v673 = vpop.f32.mrf.mxu0
    %v674 = vadd.f32 0.0, %v673
    %675 = vdwg.mxu0
    %v676 = vadd.f32 %v137, %v674
    %v677 = vxor.u32 %v676, 2147483648
    %v678 = vmul.f32 %v677, 1.442695
    %v679 = vpow.pop %v678
    %v680 = vadd.f32 %v679, 1.0
    %v681 = vrcp.pop %v680
    %v682 = vmul.f32 %v680, %v681
    %v683 = vsub.f32 1.0, %v682
    %v684 = vmul.f32 %v681, %v683
    %v685 = vadd.f32 %v681, %v684
    %vm686 = vweird.f32 %v680
    %vm687 = vweird.f32 %v681
    %vm688 = vmor %vm686, %vm687
    %v689 = vsel %vm688, %v681, %v685
    %v690 = vand.u32 2147483647, %v680
    %vm691 = vcmp.eq.f32.partialorder %v690, 8.507059e+37
    %v692 = vand.u32 %v680, 2147483648
    %v693 = vor.u32 1.1754944e-38, %v692
    %v694 = vsel %vm691, %v693, %v689
    %v695 = vmul.f32 1.0, %v694
    %v696 = vtanh.pop %v676
    %698 = vrot.lane.b32.xlu0 %v696, 64
    %v699 = vpop.permute.xlu0 %698
    %v701 = vmul.f32 %v695, %v699
    %v702 = vtanh.pop %v701
    %704 = vrot.lane.b32.xlu0 %v702, 96
    %v705 = vpop.permute.xlu0 %704
    %v707 = vmul.f32 %v695, %v705
    %v708 = vld [vmem:[%s8] sm:$0xff]
    %v709 = vld [vmem:[%s8 + $0x8] sm:$0xff]
    %v710 = vld [vmem:[%s8 + $0x10] sm:$0xff]
    %v711 = vld [vmem:[%s8 + $0x18] sm:$0xff]
    %v712 = vld [vmem:[%s9] sm:$0x1]
    %714 = vrot.lane.b32.xlu0 %v707, 32
    %v715 = vpop.permute.xlu0 %714
    %vm716 = vcmask 261120
    %v717 = vsel %vm716, %v715, 0
    %719 = vmatpush.msra.mxu0 0.0
    %720 = vmatpush.msra.mxu0 0.0
    %721 = vmatpush.msra.mxu0 0.0
    %722 = vmatpush.msra.mxu0 0.0
    %723 = vmatpush.msra.mxu0 0.0
    %724 = vmatpush.msra.mxu0 0.0
    %725 = vmatpush.msra.mxu0 0.0
    %726 = vmatpush.msra.mxu0 0.0
    %727 = vmatpush.msra.mxu0 0.0
    %728 = vmatpush.msra.mxu0 0.0
    %729 = vmatpush.msra.mxu0 0.0
    %730 = vmatpush.msra.mxu0 0.0
    %731 = vmatpush.msra.mxu0 %v711
    %732 = vmatpush.msra.mxu0 %v710
    %733 = vmatpush.msra.mxu0 %v709
    %734 = vmatpush.msra.mxu0 %v708
    %735 = vmatmul.f32.gmra.mxu0 %v717
    %v736 = vpop.f32.mrf.mxu0
    %v737 = vadd.f32 %v712, %v736
    %738 = vdwg.mxu0
    %vm739 = vcmask 73728
    %v740 = vsel %vm739, %v737, -inf
    %741 = vmax.xlane.f32.xlu0 %v740
    %v742 = vpop.xlane.xlu0 %741
    %v743 = vsub.f32 %v737, %v742
    %v744 = vmul.f32 %v743, 1.442695
    %v745 = vpow.pop %v744
    %v746 = vsel %vm739, %v745, 0.0
    %747 = vadd.xlane.f32.xlu0 %v746
    %v748 = vpop.xlane.xlu0 %747
    %v749 = vlog2.pop %v748
    %v750 = vmul.f32 %v749, 0.6931472
    %v751 = vsub.f32 %v743, %v750
    %752 = vst.msk [vmem:[#allocation9] sm:$0x1] %vm739, %v751
    // Predicated region
    $region54: #{tpu_custom_call.1} parent=1 // pred_check
      _
    $region55: #{tpu_custom_call.1} parent=1 // pred_check_branch
      %754 = sbr.rel (0) target = $region57
    $region56: #{tpu_custom_call.1} parent=1 // pred_region
      %756 = vsyncadd [#allocation5], 0
      %s758 = sshll.u32 [#allocation9], 4
      %s759 = int_to_ptr.vmem [resolvable:$true] %s758
      %s760 = sshll.u32 %s10, 4
      %s761 = int_to_ptr.hbm [resolvable:$true] %s760
      %763 = dma.vmem_to_hbm [thread:$0]  %s759, 16, %s761, [#allocation5]
    $region57: #{tpu_custom_call.1} parent=1 // pred_fallthru
      _
    // Predicated region
    $region58: #{tpu_custom_call.1} parent=1 // pred_check
      _
    $region59: #{tpu_custom_call.1} parent=1 // pred_check_branch
      %765 = sbr.rel (0) target = $region61
    $region60: #{tpu_custom_call.1} parent=1 // pred_region
      %767 = dma.done [#allocation5], 16
    $region61: #{tpu_custom_call.1} parent=1 // pred_fallthru
      _
    %768 = vsyncpa [#allocation4], 1
    %769 = vsyncpa [#allocation7], 1
    %770 = vsyncpa [#allocation5], 1

</llo_original>
